<compile_context>
chip_gen: v7x
topology: tpu7x:2x2x1
jax: 0.10.0
libtpu: 0.0.40
codegen_flags: <defaults>
</compile_context>

<pallas_src>
import functools

import jax
import jax.numpy as jnp
from jax import lax
from jax.experimental import pallas as pl
from jax.experimental.pallas import tpu as pltpu

MARGIN = 2.0
PAIRWISE_EPS = 1e-6  # torch.nn.functional.triplet_margin_loss default eps


def _round_up(x, m):
    return ((x + m - 1) // m) * m


def _vmem_limit_bytes():
    """Explicit scoped-VMEM limit, derived per chip generation."""
    try:
        cap = int(pltpu.get_tpu_info().vmem_capacity_bytes)
    except Exception:
        cap = 64 * 1024 * 1024  # conservative fallback (v7x per-core VMEM)
    # 3/4 of physical leaves headroom for Mosaic's own scratch:
    #   v5e/v6e (128 MiB physical) -> 96 MiB;  v7x (64 MiB) -> 48 MiB.
    return min((cap * 3) // 4, 96 * 1024 * 1024)


def _default_block_rows(B, D, vmem_limit_bytes):
    # 3 streamed inputs x 2 pipeline buffers + a few tile-sized elementwise
    # temporaries -> keep one (rows, D) f32 tile at <= min(4 MiB, limit/10).
    per_tile_budget = min(4 * 1024 * 1024, vmem_limit_bytes // 10)
    rows = per_tile_budget // max(1, D * 4)
    rows = max(8, min(8192, (rows // 8) * 8))
    return min(rows, _round_up(B, 8))


def _triplet_kernel(a_ref, p_ref, n_ref, out_ref, acc_ref, *,
                    total_rows, block_rows, tiles_per_slice):
    c = pl.program_id(0)          # parallel slice (TensorCore on v7x)
    i = pl.program_id(1)          # batch-tile index within the slice

    @pl.when(i == 0)
    def _init():
        acc_ref[...] = jnp.zeros_like(acc_ref)

    a = a_ref[...]                                               # (TB, D) f32
    # ||a - pos + eps||_2 and ||a - neg + eps||_2, keepdim -> (TB, 1)
    dp = jnp.sqrt(jnp.sum(jnp.square((a - p_ref[...]) + PAIRWISE_EPS),
                          axis=-1, keepdims=True))
    dn = jnp.sqrt(jnp.sum(jnp.square((a - n_ref[...]) + PAIRWISE_EPS),
                          axis=-1, keepdims=True))
    per_row = jnp.maximum(dp - dn + MARGIN, 0.0)                 # (TB, 1)

    # Mask (a) rows of the overhanging last block that read past B (no
    # wrapper-side padding) and (b) fully-phantom tiles of the shorter slice
    # (their block index is clamped in the index_map so the DMA stays
    # in-bounds). jnp.where selects, so garbage/NaN cannot propagate.
    t = c * tiles_per_slice + i
    row_idx = t * block_rows + lax.broadcasted_iota(jnp.int32, per_row.shape, 0)
    per_row = jnp.where(row_idx < total_rows, per_row, 0.0)

    # Per-slice raw sum; the mean (divide by B) is done once in the wrapper.
    acc_ref[...] += jnp.sum(per_row, keepdims=True)

    @pl.when(i == pl.num_programs(1) - 1)
    def _finalize():
        out_ref[...] = jnp.broadcast_to(acc_ref[...], out_ref.shape)


def triplet_loss(output_anchor, output_pos, output_neg, *, block_rows=None):
    """Inputs: [B, D] float32 anchor / positive / negative embeddings.

    Returns (loss, loss) like the PyTorch module.
    """
    B, D = output_anchor.shape
    assert output_pos.shape == (B, D)
    assert output_neg.shape == (B, D)

    vmem_limit = _vmem_limit_bytes()
    if block_rows is None:
        block_rows = _default_block_rows(B, D, vmem_limit)
    assert block_rows % 8 == 0 and block_rows > 0

    num_tiles = pl.cdiv(B, block_rows)          # no padding: mask handles edge
    num_slices = 2 if num_tiles >= 2 else 1     # split across TCs on v7x
    tiles_per_slice = pl.cdiv(num_tiles, num_slices)

    kernel = functools.partial(
        _triplet_kernel,
        total_rows=B,
        block_rows=block_rows,
        tiles_per_slice=tiles_per_slice,
    )

    # Clamp phantom tiles (only possible when num_tiles is odd) to the last
    # valid tile so the DMA never starts fully out of bounds; the in-kernel
    # mask zeroes their contribution.
    def in_map(c, i):
        return (jnp.minimum(c * tiles_per_slice + i, num_tiles - 1), 0)

    in_spec = pl.BlockSpec((block_rows, D), in_map)

    out = pl.pallas_call(
        kernel,
        out_shape=jax.ShapeDtypeStruct((num_slices, 8, 128), jnp.float32),
        grid_spec=pltpu.PrefetchScalarGridSpec(
            num_scalar_prefetch=0,
            grid=(num_slices, tiles_per_slice),
            in_specs=[in_spec, in_spec, in_spec],
            out_specs=pl.BlockSpec((1, 8, 128), lambda c, i: (c, 0, 0)),
            scratch_shapes=[pltpu.VMEM((1, 1), jnp.float32)],
        ),
        compiler_params=pltpu.CompilerParams(
            # Leading axis parallel (megacore sharding on v7x); the batch-tile
            # reduction axis is arbitrary (per-slice accumulator).
            dimension_semantics=("parallel", "arbitrary"),
            vmem_limit_bytes=vmem_limit,
        ),
    )(output_anchor, output_pos, output_neg)

    loss = jnp.sum(out[:, 0, 0]) / B
    return loss, loss


def _reference(a, p, n):
    # Pure-JAX mirror of torch.nn.TripletMarginLoss(margin=2.0) (p=2, eps=1e-6).
    dp = jnp.sqrt(jnp.sum(jnp.square((a - p) + PAIRWISE_EPS), axis=-1))
    dn = jnp.sqrt(jnp.sum(jnp.square((a - n) + PAIRWISE_EPS), axis=-1))
    loss = jnp.mean(jnp.maximum(dp - dn + MARGIN, 0.0))
    return loss, loss


if __name__ == "__main__":
    key = jax.random.PRNGKey(0)

    def make(b, d, k):
        k1, k2, k3 = jax.random.split(k, 3)
        return (jax.random.normal(k1, (b, d), dtype=jnp.float32),
                jax.random.normal(k2, (b, d), dtype=jnp.float32),
                jax.random.normal(k3, (b, d), dtype=jnp.float32))

    ok = True

    # Case 1: B=12, D=32, block_rows=8 -> 2 tiles over 2 parallel slices; the
    # second tile overhangs B (rows 12..15 masked, no wrapper padding).
    a, p, n = make(12, 32, jax.random.fold_in(key, 0))
    loss, loss2 = triplet_loss(a, p, n, block_rows=8)
    loss = jax.block_until_ready(loss)
    ref, _ = _reference(a, p, n)
    ok &= bool(jnp.allclose(loss, ref, rtol=1e-5, atol=1e-5))
    ok &= bool(jnp.allclose(loss2, ref, rtol=1e-5, atol=1e-5))

    # Case 2: B=20, block_rows=8 -> 3 tiles, odd split (2 slices x 2 tiles);
    # the 4th (phantom) tile is clamped in the index_map and fully masked.
    a, p, n = make(20, 32, jax.random.fold_in(key, 1))
    loss, _ = triplet_loss(a, p, n, block_rows=8)
    loss = jax.block_until_ready(loss)
    ref, _ = _reference(a, p, n)
    ok &= bool(jnp.allclose(loss, ref, rtol=1e-5, atol=1e-5))

    # Case 3: auto tile sizing (single tile, single slice).
    a, p, n = make(12, 32, jax.random.fold_in(key, 2))
    loss, _ = triplet_loss(a, p, n)
    loss = jax.block_until_ready(loss)
    ref, _ = _reference(a, p, n)
    ok &= bool(jnp.allclose(loss, ref, rtol=1e-5, atol=1e-5))

    assert ok, "triplet_loss kernel mismatch vs reference"
    print("KERNEL_OK")
</pallas_src>

<mosaic_0001>
module attributes {stable_mosaic.version = 11 : i64} {
  func.func @_triplet_kernel(%arg0: i32, %arg1: i32, %arg2: memref<8x32xf32, #tpu.memory_space<vmem>>, %arg3: memref<8x32xf32, #tpu.memory_space<vmem>>, %arg4: memref<8x32xf32, #tpu.memory_space<vmem>>, %arg5: memref<1x8x128xf32, #tpu.memory_space<vmem>>, %arg6: memref<1x1xf32, #tpu.memory_space<vmem>>) attributes {dimension_semantics = [#tpu.dimension_semantics<parallel>, #tpu.dimension_semantics<arbitrary>], iteration_bounds = array<i64: 2, 1>, scalar_prefetch = 0 : i64, scratch_operands = 1 : i64, tpu.core_type = #tpu.core_type<tc>, window_params = [{transform_indices = @transform_0, window_bounds = array<i64: 8, 32>}, {transform_indices = @transform_1, window_bounds = array<i64: 8, 32>}, {transform_indices = @transform_2, window_bounds = array<i64: 8, 32>}, {transform_indices = @transform_3, window_bounds = array<i64: 1, 8, 128>}]} {
    %c0_i32 = arith.constant 0 : i32
    %0 = arith.cmpi eq, %arg1, %c0_i32 : i32
    %1 = arith.extui %0 : i1 to i32
    %c0_i32_0 = arith.constant 0 : i32
    %2 = arith.cmpi ne, %1, %c0_i32_0 : i32
    scf.if %2 {
      %cst_19 = arith.constant 0.000000e+00 : f32
      %46 = vector.broadcast %cst_19 : f32 to vector<1x1xf32>
      %c0_20 = arith.constant 0 : index
      %c0_21 = arith.constant 0 : index
      %47 = vector.load %arg6[%c0_20, %c0_21] : memref<1x1xf32, #tpu.memory_space<vmem>>, vector<1x1xf32>
      tpu.vector_store %arg6[%c0_20, %c0_21], %46 {strides = array<i32>} : memref<1x1xf32, #tpu.memory_space<vmem>>, vector<1x1xf32>,
    } else {
    }
    %c0 = arith.constant 0 : index
    %c0_1 = arith.constant 0 : index
    %3 = vector.load %arg2[%c0, %c0_1] : memref<8x32xf32, #tpu.memory_space<vmem>>, vector<8x32xf32>
    %c0_2 = arith.constant 0 : index
    %c0_3 = arith.constant 0 : index
    %4 = vector.load %arg3[%c0_2, %c0_3] : memref<8x32xf32, #tpu.memory_space<vmem>>, vector<8x32xf32>
    %5 = arith.subf %3, %4 : vector<8x32xf32>
    %cst = arith.constant 9.99999997E-7 : f32
    %6 = vector.broadcast %cst : f32 to vector<8x32xf32>
    %7 = arith.addf %5, %6 : vector<8x32xf32>
    %8 = arith.mulf %7, %7 : vector<8x32xf32>
    %cst_4 = arith.constant dense<0.000000e+00> : vector<8xf32>
    %9 = vector.multi_reduction <add>, %8, %cst_4 [1] : vector<8x32xf32> to vector<8xf32>
    %10 = vector.shape_cast %9 : vector<8xf32> to vector<8x1xf32>
    %11 = math.sqrt %10 : vector<8x1xf32>
    %c0_5 = arith.constant 0 : index
    %c0_6 = arith.constant 0 : index
    %12 = vector.load %arg4[%c0_5, %c0_6] : memref<8x32xf32, #tpu.memory_space<vmem>>, vector<8x32xf32>
    %13 = arith.subf %3, %12 : vector<8x32xf32>
    %cst_7 = arith.constant 9.99999997E-7 : f32
    %14 = vector.broadcast %cst_7 : f32 to vector<8x32xf32>
    %15 = arith.addf %13, %14 : vector<8x32xf32>
    %16 = arith.mulf %15, %15 : vector<8x32xf32>
    %cst_8 = arith.constant dense<0.000000e+00> : vector<8xf32>
    %17 = vector.multi_reduction <add>, %16, %cst_8 [1] : vector<8x32xf32> to vector<8xf32>
    %18 = vector.shape_cast %17 : vector<8xf32> to vector<8x1xf32>
    %19 = math.sqrt %18 : vector<8x1xf32>
    %20 = arith.subf %11, %19 : vector<8x1xf32>
    %cst_9 = arith.constant 2.000000e+00 : f32
    %21 = vector.broadcast %cst_9 : f32 to vector<8x1xf32>
    %22 = arith.addf %20, %21 : vector<8x1xf32>
    %cst_10 = arith.constant 0.000000e+00 : f32
    %23 = vector.broadcast %cst_10 : f32 to vector<8x1xf32>
    %24 = arith.maximumf %22, %23 : vector<8x1xf32>
    %c1_i32 = arith.constant 1 : i32
    %25 = arith.muli %arg0, %c1_i32 : i32
    %26 = arith.addi %25, %arg1 : i32
    %c8_i32 = arith.constant 8 : i32
    %27 = arith.muli %26, %c8_i32 : i32
    %28 = tpu.iota {dimensions = array<i32: 0>} : vector<8x1xi32>
    %29 = vector.broadcast %27 : i32 to vector<8x1xi32>
    %30 = arith.addi %29, %28 : vector<8x1xi32>
    %c12_i32 = arith.constant 12 : i32
    %31 = vector.broadcast %c12_i32 : i32 to vector<8x1xi32>
    %32 = arith.cmpi slt, %30, %31 : vector<8x1xi32>
    %cst_11 = arith.constant 0.000000e+00 : f32
    %33 = vector.broadcast %cst_11 : f32 to vector<8x1xf32>
    %34 = arith.select %32, %24, %33 : vector<8x1xi1>, vector<8x1xf32>
    %c0_12 = arith.constant 0 : index
    %c0_13 = arith.constant 0 : index
    %35 = vector.load %arg6[%c0_12, %c0_13] : memref<1x1xf32, #tpu.memory_space<vmem>>, vector<1x1xf32>
    %36 = vector.shape_cast %34 : vector<8x1xf32> to vector<1x8x1xf32>
    %cst_14 = arith.constant dense<0.000000e+00> : vector<1xf32>
    %37 = vector.multi_reduction <add>, %36, %cst_14 [1, 2] : vector<1x8x1xf32> to vector<1xf32>
    %38 = vector.shape_cast %37 : vector<1xf32> to vector<1x1x1xf32>
    %39 = vector.extract %38[0, 0, 0] : f32 from vector<1x1x1xf32>
    %40 = vector.broadcast %39 : f32 to vector<1x1xf32>
    %41 = arith.addf %35, %40 : vector<1x1xf32>
    %c0_15 = arith.constant 0 : index
    %c0_16 = arith.constant 0 : index
    %42 = vector.load %arg6[%c0_15, %c0_16] : memref<1x1xf32, #tpu.memory_space<vmem>>, vector<1x1xf32>
    tpu.vector_store %arg6[%c0_15, %c0_16], %41 {strides = array<i32>} : memref<1x1xf32, #tpu.memory_space<vmem>>, vector<1x1xf32>,
    %c0_i32_17 = arith.constant 0 : i32
    %43 = arith.cmpi eq, %arg1, %c0_i32_17 : i32
    %44 = arith.extui %43 : i1 to i32
    %c0_i32_18 = arith.constant 0 : i32
    %45 = arith.cmpi ne, %44, %c0_i32_18 : i32
    scf.if %45 {
      %c0_19 = arith.constant 0 : index
      %c0_20 = arith.constant 0 : index
      %46 = vector.load %arg6[%c0_19, %c0_20] : memref<1x1xf32, #tpu.memory_space<vmem>>, vector<1x1xf32>
      %47 = vector.shape_cast %46 : vector<1x1xf32> to vector<1x1x1xf32>
      %48 = vector.broadcast %47 : vector<1x1x1xf32> to vector<1x8x128xf32>
      %c0_21 = arith.constant 0 : index
      %c0_22 = arith.constant 0 : index
      %c0_23 = arith.constant 0 : index
      %49 = vector.load %arg5[%c0_21, %c0_22, %c0_23] : memref<1x8x128xf32, #tpu.memory_space<vmem>>, vector<1x8x128xf32>
      tpu.vector_store %arg5[%c0_21, %c0_22, %c0_23], %48 {strides = array<i32>} : memref<1x8x128xf32, #tpu.memory_space<vmem>>, vector<1x8x128xf32>,
    } else {
    }
    return
  }
  func.func @transform_0(%arg0: i32, %arg1: i32) -> (i32, i32) {
    %c1_i32 = arith.constant 1 : i32
    %0 = arith.muli %arg0, %c1_i32 : i32
    %1 = arith.addi %0, %arg1 : i32
    %c1_i32_0 = arith.constant 1 : i32
    %2 = arith.minsi %1, %c1_i32_0 : i32
    %c0_i32 = arith.constant 0 : i32
    %c0_i32_1 = arith.constant 0 : i32
    return %2, %c0_i32 : i32, i32
  }
  func.func @transform_1(%arg0: i32, %arg1: i32) -> (i32, i32) {
    %c1_i32 = arith.constant 1 : i32
    %0 = arith.muli %arg0, %c1_i32 : i32
    %1 = arith.addi %0, %arg1 : i32
    %c1_i32_0 = arith.constant 1 : i32
    %2 = arith.minsi %1, %c1_i32_0 : i32
    %c0_i32 = arith.constant 0 : i32
    %c0_i32_1 = arith.constant 0 : i32
    return %2, %c0_i32 : i32, i32
  }
  func.func @transform_2(%arg0: i32, %arg1: i32) -> (i32, i32) {
    %c1_i32 = arith.constant 1 : i32
    %0 = arith.muli %arg0, %c1_i32 : i32
    %1 = arith.addi %0, %arg1 : i32
    %c1_i32_0 = arith.constant 1 : i32
    %2 = arith.minsi %1, %c1_i32_0 : i32
    %c0_i32 = arith.constant 0 : i32
    %c0_i32_1 = arith.constant 0 : i32
    return %2, %c0_i32 : i32, i32
  }
  func.func @transform_3(%arg0: i32, %arg1: i32) -> (i32, i32, i32) {
    %c0_i32 = arith.constant 0 : i32
    %c0_i32_0 = arith.constant 0 : i32
    %c0_i32_1 = arith.constant 0 : i32
    return %arg0, %c0_i32, %c0_i32_0 : i32, i32, i32
  }
}

</mosaic_0001>

<llo_original>
// kernel: tpu_custom_call.1
$region0: #{tpu_custom_call.1}
  #allocation0 [shape = 'u32[]', space=smem, size = 0x4, offset = 0x4, fixed_abs, tag = 'smem constant byte address 0x4 - core index']
  #allocation1 [shape = 'u32[144,128]{1,0:T(1,128)}', space=vmem, size = 0x12000, scoped, tag = 'internal scratch']
  #allocation2 [shape = 'f32[1,1]{1,0:T(1,128)}', space=vmem, size = 0x200, scoped, tag = 'scratch operand']
  %s0 = inlined_call_operand.hbm [shape: f32[12,32], index: 0, kind: input, shape index: {}]
  %s1 = inlined_call_operand.hbm [shape: f32[12,32], index: 1, kind: input, shape index: {}]
  %s2 = inlined_call_operand.hbm [shape: f32[12,32], index: 2, kind: input, shape index: {}]
  %s3 = inlined_call_operand.hbm [shape: f32[2,8,128], index: 3, kind: output, shape index: {}]
  %s4 = sld [smem:[#allocation0]]
  $region65: #{tpu_custom_call.1} parent=0
    _
  %s6 = ssub.s32 1, %s4
  %s7 = scalar_select 0, %s6, %s4
  $region1: #{tpu_custom_call.1} parent=0
    #allocation3 [shape = 'u8[8192]{0}', space=vmem, size = 0x2000, scoped, tag = 'input window, operand 0']
    #allocation4 [shape = 's32[2]{0}', space=sflag, size = 0x8, scoped, tag = 'scoped memory for tpu_custom_call.1']
    #allocation5 [shape = 's32[2]{0}', space=sflag, size = 0x8, scoped, tag = 'scoped memory for tpu_custom_call.1']
    #allocation6 [shape = 'u8[8192]{0}', space=vmem, size = 0x2000, scoped, tag = 'input window, operand 1']
    #allocation7 [shape = 's32[2]{0}', space=sflag, size = 0x8, scoped, tag = 'scoped memory for tpu_custom_call.1']
    #allocation8 [shape = 'u8[8192]{0}', space=vmem, size = 0x2000, scoped, tag = 'input window, operand 2']
    #allocation9 [shape = 'u8[8192]{0}', space=vmem, size = 0x2000, scoped, tag = 'output window, operand 0']
    %8 = vsyncpa [#allocation4], 0
    %s9 = scalar_lea.sflag [#allocation4], 1
    %10 = vsyncpa %s9, 0
    %11 = vsyncpa [#allocation7], 0
    %s12 = scalar_lea.sflag [#allocation7], 1
    %13 = vsyncpa %s12, 0
    %14 = vsyncpa [#allocation5], 0
    %s15 = scalar_lea.sflag [#allocation5], 1
    %16 = vsyncpa %s15, 0
    loop: start=0, step=1, limit=4
    $region2: #{tpu_custom_call.1} parent=1 // loop_pre_header
      _
    $region3: #{tpu_custom_call.1} parent=1 // loop_header
      %s18 = sphi 0, %s22
      %p19 = scmp.ge.s32.totalorder %s18, 4
      %s25 = sphi 0, %s37
      %s26 = sphi 0, %s33
      %s27 = sphi 0, %s25
      %s28 = sphi 0, %s26
      %s29 = sphi 0, %s27
      %s30 = sphi 0, %s28
      %s46 = sphi 0, %s48
      %s49 = sphi 0, %s46
      %s50 = sphi 0, %s49
      %s66 = sphi 0, %s50
      %s78 = sphi 0, %s80
      %s81 = sphi 0, %s78
      %s82 = sphi 0, %s81
      %s98 = sphi 0, %s82
      %s110 = sphi 0, %s112
      %s113 = sphi 0, %s110
      %s114 = sphi 0, %s113
      %s130 = sphi 0, %s114
      %s136 = sphi 0, %s138
      %s139 = sphi 0, %s136
      %s140 = sphi 0, %s139
      %s156 = sphi 0, %s140
    $region4: #{tpu_custom_call.1} parent=1 // loop_header_branch
      %21 = sbr.rel (%p19) target = $region8
    $region5: #{tpu_custom_call.1} parent=1 // loop_body
      %s23 = ssub.s32 %s18, 1
      %s24 = ssub.s32 %s18, 2
      %s31 = sadd.s32 1, %s26
      %p32 = scmp.ge.s32.totalorder %s31, 1
      %s33 = scalar_select %p32, 0, %s31
      %s34 = sadd.s32 1, %s25
      %s35 = scalar_select %p32, %s34, %s25
      %p36 = scmp.ge.s32.totalorder %s35, 2
      %s37 = scalar_select %p36, 0, %s35
      %s38 = sadd.s32 %s25, %s26
      %p39 = scmp.lt.s32.totalorder %s38, 1
      %s40 = scalar_select %p39, %s38, 1
      %s41 = sadd.s32 %s37, %s33
      %p42 = scmp.lt.s32.totalorder %s41, 1
      %s43 = scalar_select %p42, %s41, 1
      %s44 = ssub.s32 %s40, %s43
      %p45 = scmp.eq.s32.totalorder %s44, 0
      %s47 = sadd.s32 %s46, 1
      %s48 = scalar_select %p45, %s46, %s47
      %p51 = pneg %p45
      %p52 = scmp.eq.s32.totalorder %s18, 1
      %p53 = por %p51, %p52
      %p54 = scmp.ne.s32.totalorder %s46, %s49
      %p55 = scmp.eq.s32.totalorder %s18, 0
      %p56 = por %p54, %p55
      %p57 = scmp.ne.s32.totalorder %s46, %s49
      %p58 = scmp.eq.s32.totalorder %s23, 1
      %p59 = por %p57, %p58
      %p60 = scmp.ne.s32.totalorder %s49, %s50
      %p61 = scmp.eq.s32.totalorder %s23, 0
      %p62 = por %p60, %p61
      %p63 = scmp.ne.s32.totalorder %s49, %s50
      %p64 = scmp.eq.s32.totalorder %s24, 1
      %p65 = por %p63, %p64
      %p67 = scmp.ne.s32.totalorder %s50, %s66
      %p68 = scmp.eq.s32.totalorder %s24, 0
      %p69 = por %p67, %p68
      %s70 = sadd.s32 %s25, %s26
      %p71 = scmp.lt.s32.totalorder %s70, 1
      %s72 = scalar_select %p71, %s70, 1
      %s73 = sadd.s32 %s37, %s33
      %p74 = scmp.lt.s32.totalorder %s73, 1
      %s75 = scalar_select %p74, %s73, 1
      %s76 = ssub.s32 %s72, %s75
      %p77 = scmp.eq.s32.totalorder %s76, 0
      %s79 = sadd.s32 %s78, 1
      %s80 = scalar_select %p77, %s78, %s79
      %p83 = pneg %p77
      %p84 = scmp.eq.s32.totalorder %s18, 1
      %p85 = por %p83, %p84
      %p86 = scmp.ne.s32.totalorder %s78, %s81
      %p87 = scmp.eq.s32.totalorder %s18, 0
      %p88 = por %p86, %p87
      %p89 = scmp.ne.s32.totalorder %s78, %s81
      %p90 = scmp.eq.s32.totalorder %s23, 1
      %p91 = por %p89, %p90
      %p92 = scmp.ne.s32.totalorder %s81, %s82
      %p93 = scmp.eq.s32.totalorder %s23, 0
      %p94 = por %p92, %p93
      %p95 = scmp.ne.s32.totalorder %s81, %s82
      %p96 = scmp.eq.s32.totalorder %s24, 1
      %p97 = por %p95, %p96
      %p99 = scmp.ne.s32.totalorder %s82, %s98
      %p100 = scmp.eq.s32.totalorder %s24, 0
      %p101 = por %p99, %p100
      %s102 = sadd.s32 %s25, %s26
      %p103 = scmp.lt.s32.totalorder %s102, 1
      %s104 = scalar_select %p103, %s102, 1
      %s105 = sadd.s32 %s37, %s33
      %p106 = scmp.lt.s32.totalorder %s105, 1
      %s107 = scalar_select %p106, %s105, 1
      %s108 = ssub.s32 %s104, %s107
      %p109 = scmp.eq.s32.totalorder %s108, 0
      %s111 = sadd.s32 %s110, 1
      %s112 = scalar_select %p109, %s110, %s111
      %p115 = pneg %p109
      %p116 = scmp.eq.s32.totalorder %s18, 1
      %p117 = por %p115, %p116
      %p118 = scmp.ne.s32.totalorder %s110, %s113
      %p119 = scmp.eq.s32.totalorder %s18, 0
      %p120 = por %p118, %p119
      %p121 = scmp.ne.s32.totalorder %s110, %s113
      %p122 = scmp.eq.s32.totalorder %s23, 1
      %p123 = por %p121, %p122
      %p124 = scmp.ne.s32.totalorder %s113, %s114
      %p125 = scmp.eq.s32.totalorder %s23, 0
      %p126 = por %p124, %p125
      %p127 = scmp.ne.s32.totalorder %s113, %s114
      %p128 = scmp.eq.s32.totalorder %s24, 1
      %p129 = por %p127, %p128
      %p131 = scmp.ne.s32.totalorder %s114, %s130
      %p132 = scmp.eq.s32.totalorder %s24, 0
      %p133 = por %p131, %p132
      %s134 = ssub.s32 %s25, %s37
      %p135 = scmp.eq.s32.totalorder %s134, 0
      %s137 = sadd.s32 %s136, 1
      %s138 = scalar_select %p135, %s136, %s137
      %p141 = pneg %p135
      %p142 = scmp.eq.s32.totalorder %s18, 1
      %p143 = por %p141, %p142
      %p144 = scmp.ne.s32.totalorder %s136, %s139
      %p145 = scmp.eq.s32.totalorder %s18, 0
      %p146 = por %p144, %p145
      %p147 = scmp.ne.s32.totalorder %s136, %s139
      %p148 = scmp.eq.s32.totalorder %s23, 1
      %p149 = por %p147, %p148
      %p150 = scmp.ne.s32.totalorder %s139, %s140
      %p151 = scmp.eq.s32.totalorder %s23, 0
      %p152 = por %p150, %p151
      %p153 = scmp.ne.s32.totalorder %s139, %s140
      %p154 = scmp.eq.s32.totalorder %s24, 1
      %p155 = por %p153, %p154
      %p157 = scmp.ne.s32.totalorder %s140, %s156
      %p158 = scmp.eq.s32.totalorder %s24, 0
      %p159 = por %p157, %p158
      %p160 = scmp.le.s32.totalorder 1, %s18
      %p161 = scmp.lt.s32.totalorder %s18, 3
      %p162 = pnand %p160, %p161
      %p163 = pneg %p162
      // Predicated region
      $region9: #{tpu_custom_call.1} parent=5 // pred_check
        _
      $region10: #{tpu_custom_call.1} parent=5 // pred_check_branch
        %165 = sbr.rel (%p162) target = $region12
      $region11: #{tpu_custom_call.1} parent=5 // pred_region
        %s166 = ssub.s32 %s18, 1
      $region12: #{tpu_custom_call.1} parent=5 // pred_fallthru
        _
      %p167 = scmp.lt.s32.totalorder %s18, 2
      // Predicated region
      $region13: #{tpu_custom_call.1} parent=5 // pred_check
        %p168 = pneg %p167
      $region14: #{tpu_custom_call.1} parent=5 // pred_check_branch
        %170 = sbr.rel (%p168) target = $region16
      $region15: #{tpu_custom_call.1} parent=5 // pred_region
        // Predicated region
        $region17: #{tpu_custom_call.1} parent=15 // pred_check
          %p171 = pneg %p56
        $region18: #{tpu_custom_call.1} parent=15 // pred_check_branch
          %173 = sbr.rel (%p171) target = $region20
        $region19: #{tpu_custom_call.1} parent=15 // pred_region
          %s174 = sand.u32 %s46, 1
          %s175 = scalar_lea.sflag [#allocation4], %s174
          %s176 = sand.u32 %s46, 1
          %s177 = smul.addr %s176, 8
          %s178 = scalar_lea.vmem [#allocation3], %s177
          %s179 = sadd.s32 %s25, %s26
          %p180 = scmp.lt.s32.totalorder %s179, 1
          %s181 = scalar_select %p180, %s179, 1
          %s183 = ssub.s32 128, 128
          %184 = vsyncadd %s175, %s183
          %s185 = smul.addr %s181, 128
          %s186 = scalar_lea.hbm %s0, %s185
          %s188 = sshll.u32 %s178, 4
          %s189 = int_to_ptr.vmem [resolvable:$true] %s188
          %191 = dma.hbm_to_vmem [thread:$0]  %s186, 128, %s189, %s175
        $region20: #{tpu_custom_call.1} parent=15 // pred_fallthru
          _
        // Predicated region
        $region21: #{tpu_custom_call.1} parent=15 // pred_check
          %p192 = pneg %p88
        $region22: #{tpu_custom_call.1} parent=15 // pred_check_branch
          %194 = sbr.rel (%p192) target = $region24
        $region23: #{tpu_custom_call.1} parent=15 // pred_region
          %s195 = sand.u32 %s18, 1
          %s196 = scalar_lea.sflag [#allocation7], %s195
          %s197 = sand.u32 %s78, 1
          %s198 = smul.addr %s197, 8
          %s199 = scalar_lea.vmem [#allocation6], %s198
          %s200 = sadd.s32 %s25, %s26
          %p201 = scmp.lt.s32.totalorder %s200, 1
          %s202 = scalar_select %p201, %s200, 1
          %s204 = ssub.s32 128, 128
          %205 = vsyncadd %s196, %s204
          %s206 = smul.addr %s202, 128
          %s207 = scalar_lea.hbm %s1, %s206
          %s209 = sshll.u32 %s199, 4
          %s210 = int_to_ptr.vmem [resolvable:$true] %s209
          %212 = dma.hbm_to_vmem [thread:$0]  %s207, 128, %s210, %s196
        $region24: #{tpu_custom_call.1} parent=15 // pred_fallthru
          _
        // Predicated region
        $region25: #{tpu_custom_call.1} parent=15 // pred_check
          %p213 = pneg %p120
        $region26: #{tpu_custom_call.1} parent=15 // pred_check_branch
          %215 = sbr.rel (%p213) target = $region28
        $region27: #{tpu_custom_call.1} parent=15 // pred_region
          %s216 = sand.u32 %s18, 1
          %s217 = scalar_lea.sflag [#allocation7], %s216
          %s218 = sand.u32 %s110, 1
          %s219 = smul.addr %s218, 8
          %s220 = scalar_lea.vmem [#allocation8], %s219
          %s221 = sadd.s32 %s25, %s26
          %p222 = scmp.lt.s32.totalorder %s221, 1
          %s223 = scalar_select %p222, %s221, 1
          %s225 = ssub.s32 128, 128
          %226 = vsyncadd %s217, %s225
          %s227 = smul.addr %s223, 128
          %s228 = scalar_lea.hbm %s2, %s227
          %s230 = sshll.u32 %s220, 4
          %s231 = int_to_ptr.vmem [resolvable:$true] %s230
          %233 = dma.hbm_to_vmem [thread:$0]  %s228, 128, %s231, %s217
        $region28: #{tpu_custom_call.1} parent=15 // pred_fallthru
          _
      $region16: #{tpu_custom_call.1} parent=5 // pred_fallthru
        _
      %p234 = scmp.le.s32.totalorder 1, %s18
      %p235 = scmp.lt.s32.totalorder %s18, 3
      %p236 = pnand %p234, %p235
      %p237 = pneg %p236
      // Predicated region
      $region29: #{tpu_custom_call.1} parent=5 // pred_check
        _
      $region30: #{tpu_custom_call.1} parent=5 // pred_check_branch
        %239 = sbr.rel (%p236) target = $region32
      $region31: #{tpu_custom_call.1} parent=5 // pred_region
        %s240 = ssub.s32 %s18, 1
        %s241 = sand.u32 %s49, 1
        %s242 = scalar_lea.sflag [#allocation4], %s241
        %s243 = sand.u32 %s49, 1
        %s244 = smul.addr %s243, 8
        %s245 = scalar_lea.vmem [#allocation3], %s244
        // Predicated region
        $region33: #{tpu_custom_call.1} parent=31 // pred_check
          %p246 = pneg %p62
        $region34: #{tpu_custom_call.1} parent=31 // pred_check_branch
          %248 = sbr.rel (%p246) target = $region36
        $region35: #{tpu_custom_call.1} parent=31 // pred_region
          %249 = dma.done %s242, 128
        $region36: #{tpu_custom_call.1} parent=31 // pred_fallthru
          _
        %s250 = sand.u32 %s23, 1
        %s251 = scalar_lea.sflag [#allocation7], %s250
        %s252 = sand.u32 %s81, 1
        %s253 = smul.addr %s252, 8
        %s254 = scalar_lea.vmem [#allocation6], %s253
        // Predicated region
        $region37: #{tpu_custom_call.1} parent=31 // pred_check
          %p255 = pneg %p94
        $region38: #{tpu_custom_call.1} parent=31 // pred_check_branch
          %257 = sbr.rel (%p255) target = $region40
        $region39: #{tpu_custom_call.1} parent=31 // pred_region
          %258 = dma.done %s251, 128
        $region40: #{tpu_custom_call.1} parent=31 // pred_fallthru
          _
        %s259 = sand.u32 %s23, 1
        %s260 = scalar_lea.sflag [#allocation7], %s259
        %s261 = sand.u32 %s113, 1
        %s262 = smul.addr %s261, 8
        %s263 = scalar_lea.vmem [#allocation8], %s262
        // Predicated region
        $region41: #{tpu_custom_call.1} parent=31 // pred_check
          %p264 = pneg %p126
        $region42: #{tpu_custom_call.1} parent=31 // pred_check_branch
          %266 = sbr.rel (%p264) target = $region44
        $region43: #{tpu_custom_call.1} parent=31 // pred_region
          %267 = dma.done %s260, 128
        $region44: #{tpu_custom_call.1} parent=31 // pred_fallthru
          _
        %s268 = sand.u32 %s49, 1
        %s269 = scalar_lea.sflag [#allocation4], %s268
        %s270 = sand.u32 %s49, 1
        %s271 = smul.addr %s270, 8
        %s272 = scalar_lea.vmem [#allocation3], %s271
        %p273 = pneg %p62
        %p274 = pneg %p59
        %s275 = sand.u32 %s23, 1
        %s276 = scalar_lea.sflag [#allocation7], %s275
        %s277 = sand.u32 %s81, 1
        %s278 = smul.addr %s277, 8
        %s279 = scalar_lea.vmem [#allocation6], %s278
        %p280 = pneg %p94
        %p281 = pneg %p91
        %s282 = sand.u32 %s23, 1
        %s283 = scalar_lea.sflag [#allocation7], %s282
        %s284 = sand.u32 %s113, 1
        %s285 = smul.addr %s284, 8
        %s286 = scalar_lea.vmem [#allocation8], %s285
        %p287 = pneg %p126
        %p288 = pneg %p123
        %p289 = pneg %p152
        %p290 = pneg %p149
        %s291 = sand.u32 %s139, 1
        %s292 = scalar_lea.sflag [#allocation5], %s291
        %s293 = sand.u32 %s139, 1
        %s294 = smul.addr %s293, 8
        %s295 = scalar_lea.vmem [#allocation9], %s294
        %s296 = sadd.s32 %s27, %s28
        %p297 = scmp.lt.s32.totalorder %s296, 1
        %s298 = scalar_select %p297, %s296, 1
        %s299 = sadd.s32 %s27, %s28
        %p300 = scmp.lt.s32.totalorder %s299, 1
        %s301 = scalar_select %p300, %s299, 1
        %s302 = sadd.s32 %s27, %s28
        %p303 = scmp.lt.s32.totalorder %s302, 1
        %s304 = scalar_select %p303, %s302, 1
        %p305 = scmp.eq.s32.totalorder %s28, 0
        // Predicated region
        $region45: #{tpu_custom_call.1} parent=31 // pred_check
          %p306 = pneg %p305
        $region46: #{tpu_custom_call.1} parent=31 // pred_check_branch
          %308 = sbr.rel (%p306) target = $region48
        $region47: #{tpu_custom_call.1} parent=31 // pred_region
          %vm309 = vcmask 0
          %310 = vst.msk [vmem:[#allocation2] sm:$0x1] %vm309, 0.0
        $region48: #{tpu_custom_call.1} parent=31 // pred_fallthru
          _
        %v311 = vld [vmem:[%s245] sm:$0xff]
        %v312 = vld [vmem:[%s254] sm:$0xff]
        %v313 = vsub.f32 %v311, %v312
        %v314 = vadd.f32 %v313, 1e-06
        %v315 = vmul.f32 %v314, %v314
        %vm316 = vcmask 261120
        %v317 = vsel %vm316, %v315, 0.0
        %318 = vadd.xlane.f32.xlu0 %v317
        %v319 = vpop.xlane.xlu0 %318
        %v320 = vrsqrt.pop %v319
        %v321 = vmul.f32 %v319, %v320
        %vm322 = vcmp.eq.f32.partialorder %v319, inf
        %v323 = vsel %vm322, %v319, %v321
        %vm324 = vcmp.eq.f32.partialorder %v319, 0.0
        %v325 = vand.u32 %v319, 2147483648
        %v326 = vsel %vm324, %v325, %v323
        %v327 = vld [vmem:[%s263] sm:$0xff]
        %v328 = vsub.f32 %v311, %v327
        %v329 = vadd.f32 %v328, 1e-06
        %v330 = vmul.f32 %v329, %v329
        %v331 = vsel %vm316, %v330, 0.0
        %332 = vadd.xlane.f32.xlu0 %v331
        %v333 = vpop.xlane.xlu0 %332
        %v334 = vrsqrt.pop %v333
        %v335 = vmul.f32 %v333, %v334
        %vm336 = vcmp.eq.f32.partialorder %v333, inf
        %v337 = vsel %vm336, %v333, %v335
        %vm338 = vcmp.eq.f32.partialorder %v333, 0.0
        %v339 = vand.u32 %v333, 2147483648
        %v340 = vsel %vm338, %v339, %v337
        %v341 = vsub.f32 %v326, %v340
        %v342 = vadd.f32 %v341, 2.0
        %v343 = vmax.f32 %v342, 0.0
        %s344 = sadd.s32 %s27, %s28
        %s345 = smul.u32 %s344, 8
        %v346 = vlaneseq
        %v347 = vshrl.u32 %v346, 7
        %v348 = vstv %s345
        %v349 = vadd.s32 %v348, %v347
        %vm350 = vcmp.lt.s32.totalorder %v349, 12
        %v351 = vsel %vm350, %v343, 0.0
        %v352 = vld [vmem:[#allocation2] sm:$0x1]
        %vm353 = vcmask 7168
        %v354 = vsel %vm353, %v351, 0.0
        %355 = vadd.xlane.f32.xlu0 %v354
        %v356 = vpop.xlane.xlu0 %355
        %v357 = vrot.slane %v356, 4
        %v358 = vadd.f32 %v356, %v357
        %v359 = vrot.slane %v358, 2
        %v360 = vadd.f32 %v358, %v359
        %v361 = vrot.slane %v360, 1
        %v362 = vadd.f32 %v360, %v361
        %s363 = vtos %v362
        %v364 = vstv %s363
        %v365 = vadd.f32 %v352, %v364
        %vm366 = vcmask 0
        %367 = vst.msk [vmem:[#allocation2] sm:$0x1] %vm366, %v365
        // Predicated region
        $region49: #{tpu_custom_call.1} parent=31 // pred_check
          %p368 = pneg %p305
        $region50: #{tpu_custom_call.1} parent=31 // pred_check_branch
          %370 = sbr.rel (%p368) target = $region52
        $region51: #{tpu_custom_call.1} parent=31 // pred_region
          %v371 = vld [vmem:[#allocation2] sm:$0x1]
          %v373 = vlaneseq
          %v374 = vshrl.u32 %v373, 7
          %v375 = vsub.s32 0, %v374
          %v376 = vrot.slane %v371, %v375
          %377 = vset.pattern.permute.xlu0 0
          %378 = vperm.xlu0 %377, %v376
          %v379 = vpop.permute.xlu0 %378
          %381 = vst [vmem:[%s295] sm:$0xff] %v379
        $region52: #{tpu_custom_call.1} parent=31 // pred_fallthru
          _
        %s382 = sand.u32 %s139, 1
        %s383 = scalar_lea.sflag [#allocation5], %s382
        %s384 = sand.u32 %s139, 1
        %s385 = smul.addr %s384, 8
        %s386 = scalar_lea.vmem [#allocation9], %s385
        // Predicated region
        $region53: #{tpu_custom_call.1} parent=31 // pred_check
          %p387 = pneg %p149
        $region54: #{tpu_custom_call.1} parent=31 // pred_check_branch
          %389 = sbr.rel (%p387) target = $region56
        $region55: #{tpu_custom_call.1} parent=31 // pred_region
          %s391 = ssub.s32 128, 128
          %392 = vsyncadd %s383, %s391
          %s393 = smul.addr %s27, 128
          %s394 = scalar_lea.hbm %s3, %s393
          %s396 = sshll.u32 %s386, 4
          %s397 = int_to_ptr.vmem [resolvable:$true] %s396
          %399 = dma.vmem_to_hbm [thread:$0]  %s397, 128, %s394, %s383
        $region56: #{tpu_custom_call.1} parent=31 // pred_fallthru
          _
      $region32: #{tpu_custom_call.1} parent=5 // pred_fallthru
        _
      %p400 = scmp.le.s32.totalorder 2, %s18
      // Predicated region
      $region57: #{tpu_custom_call.1} parent=5 // pred_check
        %p401 = pneg %p400
      $region58: #{tpu_custom_call.1} parent=5 // pred_check_branch
        %403 = sbr.rel (%p401) target = $region60
      $region59: #{tpu_custom_call.1} parent=5 // pred_region
        %s404 = ssub.s32 %s18, 2
        // Predicated region
        $region61: #{tpu_custom_call.1} parent=59 // pred_check
          %p405 = pneg %p155
        $region62: #{tpu_custom_call.1} parent=59 // pred_check_branch
          %407 = sbr.rel (%p405) target = $region64
        $region63: #{tpu_custom_call.1} parent=59 // pred_region
          %s408 = sand.u32 %s140, 1
          %s409 = scalar_lea.sflag [#allocation5], %s408
          %s410 = sand.u32 %s140, 1
          %s411 = smul.addr %s410, 8
          %s412 = scalar_lea.vmem [#allocation9], %s411
          %413 = dma.done %s409, 128
        $region64: #{tpu_custom_call.1} parent=59 // pred_fallthru
          _
      $region60: #{tpu_custom_call.1} parent=5 // pred_fallthru
        _
    $region6: #{tpu_custom_call.1} parent=1 // loop_footer
      %s22 = sadd.s32 1, %s18
    $region7: #{tpu_custom_call.1} parent=1 // loop_footer_branch
      %17 = sbr.rel target = $region3
    $region8: #{tpu_custom_call.1} parent=1 // loop_exit
      _
    %414 = vsyncpa [#allocation4], 1
    %s415 = scalar_lea.sflag [#allocation4], 1
    %416 = vsyncpa %s415, 1
    %417 = vsyncpa [#allocation7], 1
    %s418 = scalar_lea.sflag [#allocation7], 1
    %419 = vsyncpa %s418, 1
    %420 = vsyncpa [#allocation5], 1
    %s421 = scalar_lea.sflag [#allocation5], 1
    %422 = vsyncpa %s421, 1

</llo_original>
